<compile_context>
chip_gen: v6e
topology: v6e:2x2x1
jax: 0.10.0
libtpu: 0.0.40
codegen_flags: <defaults>
</compile_context>

<pallas_src>
import functools

import jax
import jax.numpy as jnp
from jax.experimental import pallas as pl
from jax.experimental.pallas import tpu as pltpu


def _rmsnorm_kernel(x_ref, w_ref, o_ref, *, eps, exact_torch_cast):
    # x_ref: (TILE_ROWS, DIM) tile of input
    # w_ref: (1, DIM) weight (broadcast over rows)
    x = x_ref[...]
    xf = x.astype(jnp.float32)
    # mean of squares over the last (hidden) axis -> XLU; rsqrt -> EUP.
    ms = jnp.mean(xf * xf, axis=-1, keepdims=True)
    inv = jax.lax.rsqrt(ms + eps)
    if exact_torch_cast:
        # Bit-faithful to torch: .type_as(x) first, then * weight, then cast.
        normed = (xf * inv).astype(x.dtype)
        o_ref[...] = (normed * w_ref[...]).astype(o_ref.dtype)
    else:
        # Fused single-cast path (fewer full-tile cast passes; tiny rounding
        # difference vs torch for sub-f32 activation dtypes).
        wf = w_ref[...].astype(jnp.float32)
        o_ref[...] = (xf * inv * wf).astype(o_ref.dtype)


def _chip_info():
    """Return (vmem_capacity_bytes, num_tensorcores) for the current chip."""
    kind = ""
    try:
        kind = jax.devices()[0].device_kind.lower()
    except Exception:
        pass
    is_v7 = ("v7" in kind) or ("7x" in kind)

    vmem_cap = None
    try:
        vmem_cap = int(pltpu.get_tpu_info().vmem_capacity_bytes)
    except Exception:
        vmem_cap = None
    if not vmem_cap or vmem_cap <= 0:
        # Generation-aware fallback: v5e/v6e have 128 MiB VMEM, v7x 64 MiB/TC.
        vmem_cap = (64 << 20) if is_v7 else (128 << 20)

    num_tc = 2 if is_v7 else 1
    return vmem_cap, num_tc


def _sublane_pack(dtype):
    itemsize = jnp.dtype(dtype).itemsize
    if itemsize >= 4:
        return 8
    if itemsize == 2:
        return 16
    return 32


def _pick_tile_rows(rows, dim, x_itemsize, out_itemsize, pack, vmem_cap, num_tc):
    # Tiny row counts: one block spanning all rows (block dim == full array
    # dim is always a legal block shape).
    if rows <= pack:
        return rows

    # Target ~4 MiB per input block: large enough that the ~0.35 us
    # per-grid-step pipeline overhead is negligible even at v7x HBM bandwidth,
    # small enough to double-buffer comfortably.
    target_block_bytes = 4 << 20
    t = max(pack, target_block_bytes // (dim * x_itemsize))

    # Honest per-row VMEM footprint: double-buffered input + output blocks
    # plus ~3 live f32 temporaries (upcast, square/normed, scaled) per element.
    per_row = dim * (2 * x_itemsize + 2 * out_itemsize + 12)
    budget = max(vmem_cap // 2, 4 << 20)      # leave headroom for the compiler
    t = min(t, max(pack, budget // per_row))

    # Never larger than the row count (pack-floored so the block stays a
    # multiple of the sublane pack and <= the array extent).
    t = min(t, (rows // pack) * pack)

    # Multi-TensorCore chips (v7x): keep >= 2 grid steps per core so each
    # core's software pipeline has prefetch/compute/writeback to overlap.
    # Single-TC chips (v5e/v6e) are never forced to split.
    if num_tc >= 2 and rows > 2 * num_tc * pack:
        min_steps = 2 * num_tc
        cap = ((pl.cdiv(rows, min_steps) + pack - 1) // pack) * pack
        t = min(t, cap)

    t = max(pack, (t // pack) * pack)

    # Prefer a tile that divides `rows` exactly (skips the masked partial
    # final block) if one is close by; otherwise rely on Pallas's masked
    # handling of the ragged last block -- no host-side pad/slice either way.
    if rows % t != 0:
        lo = max(pack, t - 64 * pack)
        for cand in range(t, lo - 1, -pack):
            if rows % cand == 0:
                t = cand
                break
    return t


def rmsnorm(x, weight, eps=1e-4, out_dtype=None, exact_torch_cast=True):
    """RMSNorm over the last axis.

    x: (..., dim); weight: (dim,).
    out_dtype=None matches PyTorch promotion: promote(x.dtype, weight.dtype).
    Recommended hot-path config for bf16 activations: out_dtype=x.dtype
    (halves output HBM traffic; diverges from torch's promoted output dtype).
    """
    dim = x.shape[-1]
    assert weight.shape == (dim,)
    lead_shape = x.shape[:-1]
    rows = 1
    for s in lead_shape:
        rows *= s
    x2d = x.reshape(rows, dim)

    if out_dtype is None:
        out_dtype = jnp.promote_types(x.dtype, weight.dtype)
    w2d = weight.reshape(1, dim)

    x_itemsize = jnp.dtype(x.dtype).itemsize
    out_itemsize = jnp.dtype(out_dtype).itemsize
    pack = _sublane_pack(x.dtype)
    vmem_cap, num_tc = _chip_info()

    tile_rows = _pick_tile_rows(rows, dim, x_itemsize, out_itemsize, pack,
                                vmem_cap, num_tc)
    grid_rows = pl.cdiv(rows, tile_rows)   # ragged last block handled by Pallas

    # Explicit scoped-VMEM limit sized to the actual double-buffered tiles
    # (+ f32 temporaries) with margin.
    tile_elems = tile_rows * dim
    w_bytes = dim * jnp.dtype(weight.dtype).itemsize
    needed = (2 * w_bytes
              + 2 * tile_elems * x_itemsize
              + 2 * tile_elems * out_itemsize
              + 3 * tile_elems * 4)
    vmem_limit = int(needed * 1.25) + (2 << 20)
    vmem_limit = max(vmem_limit, 16 << 20)
    vmem_limit = min(vmem_limit, vmem_cap - (2 << 20))

    kernel = functools.partial(_rmsnorm_kernel, eps=eps,
                               exact_torch_cast=exact_torch_cast)

    out2d = pl.pallas_call(
        kernel,
        out_shape=jax.ShapeDtypeStruct((rows, dim), out_dtype),
        grid_spec=pltpu.PrefetchScalarGridSpec(
            num_scalar_prefetch=0,
            grid=(grid_rows,),
            in_specs=[
                pl.BlockSpec((tile_rows, dim), lambda i: (i, 0)),
                pl.BlockSpec((1, dim), lambda i: (0, 0)),
            ],
            out_specs=pl.BlockSpec((tile_rows, dim), lambda i: (i, 0)),
        ),
        compiler_params=pltpu.CompilerParams(
            dimension_semantics=("parallel",),
            vmem_limit_bytes=vmem_limit),
    )(x2d, w2d)

    return out2d.reshape(*lead_shape, dim)


def rmsnorm_ref(x, weight, eps=1e-4):
    xf = x.astype(jnp.float32)
    ms = jnp.mean(xf * xf, axis=-1, keepdims=True)
    normed = (xf * jax.lax.rsqrt(ms + eps)).astype(x.dtype)
    return normed * weight


if __name__ == "__main__":
    key = jax.random.PRNGKey(0)

    # Case 1: standard shape (batch, seq, dim), f32.
    batch, seq, dim = 2, 8, 128          # hidden dim is the normalized axis
    x = jax.random.normal(key, (batch, seq, dim), dtype=jnp.float32)
    # Deterministic parameter init matching nn.Parameter(torch.ones(dim)).
    weight = jnp.ones((dim,), dtype=jnp.float32)

    out = jax.block_until_ready(rmsnorm(x, weight, eps=1e-4))
    ref = rmsnorm_ref(x, weight, eps=1e-4)
    assert out.shape == x.shape and out.dtype == x.dtype
    assert jnp.allclose(out, ref, atol=1e-5, rtol=1e-5)

    # Case 2: ragged row count (exercises the masked partial-final-block path;
    # no host-side pad/slice is used).
    x2 = jax.random.normal(jax.random.PRNGKey(1), (3, 5, dim), dtype=jnp.float32)
    out2 = jax.block_until_ready(rmsnorm(x2, weight, eps=1e-4))
    ref2 = rmsnorm_ref(x2, weight, eps=1e-4)
    assert out2.shape == x2.shape
    assert jnp.allclose(out2, ref2, atol=1e-5, rtol=1e-5)

    # Case 3: bf16 activations, f32 weight, bf16 output (recommended hot path:
    # out_dtype=x.dtype halves output HBM traffic vs torch's f32 promotion).
    x3 = jax.random.normal(jax.random.PRNGKey(2), (2, 8, dim), dtype=jnp.bfloat16)
    out3 = jax.block_until_ready(
        rmsnorm(x3, weight, eps=1e-4, out_dtype=jnp.bfloat16))
    ref3 = rmsnorm_ref(x3, weight, eps=1e-4).astype(jnp.bfloat16)
    assert out3.shape == x3.shape and out3.dtype == jnp.bfloat16
    assert jnp.allclose(out3.astype(jnp.float32), ref3.astype(jnp.float32),
                        atol=2e-2, rtol=2e-2)

    print("KERNEL_OK")
</pallas_src>

<mosaic_0001>
module attributes {stable_mosaic.version = 11 : i64} {
  func.func @_rmsnorm_kernel(%arg0: i32, %arg1: memref<16x128xf32, #tpu.memory_space<vmem>>, %arg2: memref<1x128xf32, #tpu.memory_space<vmem>>, %arg3: memref<16x128xf32, #tpu.memory_space<vmem>>) attributes {dimension_semantics = [#tpu.dimension_semantics<parallel>], iteration_bounds = array<i64: 1>, scalar_prefetch = 0 : i64, scratch_operands = 0 : i64, tpu.core_type = #tpu.core_type<tc>, window_params = [{transform_indices = @transform_0, window_bounds = array<i64: 16, 128>}, {pipeline_mode = #tpu.pipeline_mode<synchronous>, transform_indices = @transform_1, window_bounds = array<i64: 1, 128>}, {transform_indices = @transform_2, window_bounds = array<i64: 16, 128>}]} {
    %c0 = arith.constant 0 : index
    %c0_0 = arith.constant 0 : index
    %0 = vector.load %arg1[%c0, %c0_0] : memref<16x128xf32, #tpu.memory_space<vmem>>, vector<16x128xf32>
    %1 = arith.mulf %0, %0 : vector<16x128xf32>
    %cst = arith.constant dense<0.000000e+00> : vector<16xf32>
    %2 = vector.multi_reduction <add>, %1, %cst [1] : vector<16x128xf32> to vector<16xf32>
    %3 = vector.shape_cast %2 : vector<16xf32> to vector<16x1xf32>
    %cst_1 = arith.constant 1.280000e+02 : f32
    %4 = vector.broadcast %cst_1 : f32 to vector<16x1xf32>
    %5 = arith.divf %3, %4 : vector<16x1xf32>
    %cst_2 = arith.constant 9.99999974E-5 : f32
    %6 = vector.broadcast %cst_2 : f32 to vector<16x1xf32>
    %7 = arith.addf %5, %6 : vector<16x1xf32>
    %8 = math.rsqrt %7 : vector<16x1xf32>
    %9 = vector.broadcast %8 : vector<16x1xf32> to vector<16x128xf32>
    %10 = arith.mulf %0, %9 : vector<16x128xf32>
    %c0_3 = arith.constant 0 : index
    %c0_4 = arith.constant 0 : index
    %11 = vector.load %arg2[%c0_3, %c0_4] : memref<1x128xf32, #tpu.memory_space<vmem>>, vector<1x128xf32>
    %12 = vector.broadcast %11 : vector<1x128xf32> to vector<16x128xf32>
    %13 = arith.mulf %10, %12 : vector<16x128xf32>
    %c0_5 = arith.constant 0 : index
    %c0_6 = arith.constant 0 : index
    %14 = vector.load %arg3[%c0_5, %c0_6] : memref<16x128xf32, #tpu.memory_space<vmem>>, vector<16x128xf32>
    tpu.vector_store %arg3[%c0_5, %c0_6], %13 {strides = array<i32>} : memref<16x128xf32, #tpu.memory_space<vmem>>, vector<16x128xf32>,
    return
  }
  func.func @transform_0(%arg0: i32) -> (i32, i32) {
    %c0_i32 = arith.constant 0 : i32
    %c0_i32_0 = arith.constant 0 : i32
    return %arg0, %c0_i32 : i32, i32
  }
  func.func @transform_1(%arg0: i32) -> (i32, i32) {
    %c0_i32 = arith.constant 0 : i32
    %c0_i32_0 = arith.constant 0 : i32
    %c0_i32_1 = arith.constant 0 : i32
    return %c0_i32, %c0_i32_0 : i32, i32
  }
  func.func @transform_2(%arg0: i32) -> (i32, i32) {
    %c0_i32 = arith.constant 0 : i32
    %c0_i32_0 = arith.constant 0 : i32
    return %arg0, %c0_i32 : i32, i32
  }
}

</mosaic_0001>

<llo_original>
// kernel: tpu_custom_call.1
$region0: #{tpu_custom_call.1}
  #allocation0 [shape = 'u32[]', space=smem, size = 0x4, offset = 0x4, fixed_abs, tag = 'smem constant byte address 0x4 - core index']
  #allocation1 [shape = 'u32[144,128]{1,0:T(1,128)}', space=vmem, size = 0x12000, scoped, tag = 'internal scratch']
  %s0 = inlined_call_operand.hbm [shape: f32[16,128], index: 0, kind: input, shape index: {}]
  %s1 = inlined_call_operand.vmem [shape: f32[1,128], index: 1, kind: input, shape index: {}]
  %s2 = inlined_call_operand.hbm [shape: f32[16,128], index: 2, kind: output, shape index: {}]
  %s3 = sld [smem:[#allocation0]]
  $region22: #{tpu_custom_call.1} parent=0
    _
  %s5 = ssub.s32 1, %s3
  %s6 = scalar_select 0, %s5, %s3
  $region1: #{tpu_custom_call.1} parent=0
    #allocation2 [shape = 'u8[8192]{0}', space=vmem, size = 0x2000, scoped, tag = 'input window, operand 0, single buffered']
    #allocation3 [shape = 's32[1]{0}', space=sflag, size = 0x4, scoped, tag = 'scoped memory for tpu_custom_call.1']
    #allocation4 [shape = 's32[1]{0}', space=sflag, size = 0x4, scoped, tag = 'scoped memory for tpu_custom_call.1']
    #allocation5 [shape = 'u8[8192]{0}', space=vmem, size = 0x2000, scoped, tag = 'output window, operand 0, single buffered']
    %7 = vsyncpa [#allocation3], 0
    %8 = vsyncpa [#allocation4], 0
    // Predicated region
    $region2: #{tpu_custom_call.1} parent=1 // pred_check
      _
    $region3: #{tpu_custom_call.1} parent=1 // pred_check_branch
      %10 = sbr.rel (0) target = $region5
    $region4: #{tpu_custom_call.1} parent=1 // pred_region
      %s12 = ssub.s32 256, 256
      %13 = vsyncadd [#allocation3], %s12
      %s14 = sshll.u32 [#allocation2], 4
      %s15 = int_to_ptr.vmem [resolvable:$true] %s14
      %20 = dma.hbm_to_vmem [thread:$0]  %s0, 256, %s15, [#allocation3], 128, 128, 8
    $region5: #{tpu_custom_call.1} parent=1 // pred_fallthru
      _
    // Predicated region
    $region6: #{tpu_custom_call.1} parent=1 // pred_check
      _
    $region7: #{tpu_custom_call.1} parent=1 // pred_check_branch
      %22 = sbr.rel (0) target = $region9
    $region8: #{tpu_custom_call.1} parent=1 // pred_region
      _
    $region9: #{tpu_custom_call.1} parent=1 // pred_fallthru
      _
    // Predicated region
    $region10: #{tpu_custom_call.1} parent=1 // pred_check
      _
    $region11: #{tpu_custom_call.1} parent=1 // pred_check_branch
      %24 = sbr.rel (0) target = $region13
    $region12: #{tpu_custom_call.1} parent=1 // pred_region
      %25 = dma.done [#allocation3], 256
    $region13: #{tpu_custom_call.1} parent=1 // pred_fallthru
      _
    %v26 = vld [vmem:[#allocation2] sm:$0xff]
    %v27 = vld [vmem:[#allocation2 + $0x8] sm:$0xff]
    %v28 = vmul.f32 %v26, %v26
    %v29 = vmul.f32 %v27, %v27
    %30 = vadd.xlane.f32.xlu0 %v28
    %v31 = vpop.xlane.xlu0 %30
    %32 = vadd.xlane.f32.xlu0 %v29
    %v33 = vpop.xlane.xlu0 %32
    %v34 = vrcp.pop 128.0
    %v35 = vmul.f32 %v31, %v34
    %v36 = vmul.f32 %v33, %v34
    %v37 = vadd.f32 %v35, 0.0001
    %v38 = vadd.f32 %v36, 0.0001
    %v39 = vrsqrt.pop %v37
    %v40 = vrsqrt.pop %v38
    %v41 = vmul.f32 %v26, %v39
    %v42 = vmul.f32 %v27, %v40
    %v43 = vld [vmem:[%s1] sm:$0x1]
    %v45 = vlaneseq
    %v46 = vshrl.u32 %v45, 7
    %v47 = vsub.s32 0, %v46
    %v48 = vrot.slane %v43, %v47
    %v50 = vmul.f32 %v41, %v48
    %v51 = vmul.f32 %v42, %v48
    %52 = vst [vmem:[#allocation5] sm:$0xff] %v50
    %53 = vst [vmem:[#allocation5 + $0x8] sm:$0xff] %v51
    // Predicated region
    $region14: #{tpu_custom_call.1} parent=1 // pred_check
      _
    $region15: #{tpu_custom_call.1} parent=1 // pred_check_branch
      %55 = sbr.rel (0) target = $region17
    $region16: #{tpu_custom_call.1} parent=1 // pred_region
      %s57 = ssub.s32 256, 256
      %58 = vsyncadd [#allocation4], %s57
      %s59 = sshll.u32 [#allocation5], 4
      %s60 = int_to_ptr.vmem [resolvable:$true] %s59
      %65 = dma.vmem_to_hbm [thread:$0]  %s60, 256, %s2, [#allocation4], 128, 128, 8
    $region17: #{tpu_custom_call.1} parent=1 // pred_fallthru
      _
    // Predicated region
    $region18: #{tpu_custom_call.1} parent=1 // pred_check
      _
    $region19: #{tpu_custom_call.1} parent=1 // pred_check_branch
      %67 = sbr.rel (0) target = $region21
    $region20: #{tpu_custom_call.1} parent=1 // pred_region
      %68 = dma.done [#allocation4], 256
    $region21: #{tpu_custom_call.1} parent=1 // pred_fallthru
      _
    %69 = vsyncpa [#allocation3], 1
    %70 = vsyncpa [#allocation4], 1

</llo_original>
